<compile_context>
chip_gen: v7x
topology: tpu7x:2x2x1
jax: 0.10.0
libtpu: 0.0.40
codegen_flags: <defaults>
</compile_context>

<pallas_src>
import functools

import jax
import jax.numpy as jnp
from jax import lax
from jax.experimental import pallas as pl
from jax.experimental.pallas import tpu as pltpu


# --------------------------------------------------------------------------
# Kernel
# --------------------------------------------------------------------------
def _sdpa_kernel(*refs, scale, has_mask, lk_valid, lk_padded):
    if has_mask:
        q_ref, k_ref, v_ref, mask_ref, out_ref, attn_ref = refs
    else:
        q_ref, k_ref, v_ref, out_ref, attn_ref = refs
        mask_ref = None

    q = q_ref[...]                                  # (Bt, Lq_p, Dk_p)
    k = k_ref[...]                                  # (Bt, Lk_p, Dk_p)
    v = v_ref[...]                                  # (Bt, Lk_p, Dv_p)

    # Batched q @ k^T: contract the feature dim of both operands (no transpose),
    # f32 accumulation regardless of operand dtype.
    s = lax.dot_general(q, k, (((2,), (2,)), ((0,), (0,))),
                        preferred_element_type=jnp.float32)   # (Bt, Lq_p, Lk_p)
    if scale != 1.0:
        s = s * jnp.float32(scale)

    neg_big = jnp.float32(-1e30)   # finite "-inf": underflows to prob 0, no NaN rows
    if has_mask:
        s = jnp.where(mask_ref[...] != 0, neg_big, s)
    if lk_padded != lk_valid:
        # Neutralize the zero-padded key columns added for lane density.
        col = lax.broadcasted_iota(jnp.int32, s.shape, 2)
        s = jnp.where(col < lk_valid, s, neg_big)

    # Numerically-stable softmax along the key axis (exact divide for parity
    # with torch.softmax; approx reciprocal previously broke the 2e-3 check).
    m = jnp.max(s, axis=-1, keepdims=True)
    e = jnp.exp(s - m)
    denom = jnp.sum(e, axis=-1, keepdims=True)
    a = e / denom

    # dropout(p=0.0) is the identity -- omitted.
    attn_ref[...] = a.astype(attn_ref.dtype)
    # Cast probabilities to v's dtype so bf16 inputs drive the MXU in bf16.
    out_ref[...] = lax.dot_general(a.astype(v.dtype), v,
                                   (((2,), (1,)), ((0,), (0,))),
                                   preferred_element_type=jnp.float32
                                   ).astype(out_ref.dtype)


# --------------------------------------------------------------------------
# Wrapper
# --------------------------------------------------------------------------
def _round_up(x, m):
    return ((x + m - 1) // m) * m


def scaled_dot_product_attention(q, k, v, scale=None, attn_mask=None, block_b=None):
    """Pallas equivalent of ScaledDotProductAttention.forward.

    q: [B, Lq, Dk], k: [B, Lk, Dk], v: [B, Lk, Dv]
    attn_mask: optional [B, Lq, Lk] boolean (or {0,1}) mask, True == masked.
    Returns (output [B, Lq, Dv], attention [B, Lq, Lk]) in q's dtype.
    """
    B, Lq, Dk = q.shape
    Lk = k.shape[1]
    Dv = v.shape[2]
    out_dtype = q.dtype
    has_mask = attn_mask is not None
    scale_val = 1.0 if scale is None else float(scale)

    # Lane/sublane-friendly padded sizes (last dim -> x128, second-to-last -> x8).
    Lq_p = _round_up(Lq, 8)
    Lk_p = _round_up(Lk, 128)
    Dk_p = _round_up(Dk, 128)
    Dv_p = _round_up(Dv, 128)

    # Batch block: biggest that keeps the double-buffered per-step working set
    # comfortably inside every chip's *default* scoped-VMEM limit (16 MiB on v5e).
    elt = jnp.dtype(out_dtype).itemsize
    bytes_per_b = (elt * (Lq_p * Dk_p + Lk_p * Dk_p + Lk_p * Dv_p
                          + Lq_p * Dv_p + Lq_p * Lk_p)
                   + (Lq_p * Lk_p if has_mask else 0)
                   + 4 * Lq_p * Lk_p)               # f32 score/prob temporaries
    if block_b is None:
        budget = 6 * 1024 * 1024                    # x2 double-buffering -> <=12 MiB
        block_b = max(1, min(B, budget // max(bytes_per_b, 1), 8))
    B_p = _round_up(B, block_b)
    grid = (B_p // block_b,)

    def pad_to(x, shp):
        pads = [(0, t - s) for s, t in zip(x.shape, shp)]
        return jnp.pad(x, pads) if any(p[1] for p in pads) else x

    q_p = pad_to(q, (B_p, Lq_p, Dk_p))
    k_p = pad_to(k, (B_p, Lk_p, Dk_p))
    v_p = pad_to(v, (B_p, Lk_p, Dv_p))

    blk = lambda L, D: pl.BlockSpec((block_b, L, D), lambda b: (b, 0, 0))
    in_specs = [blk(Lq_p, Dk_p), blk(Lk_p, Dk_p), blk(Lk_p, Dv_p)]
    args = [q_p, k_p, v_p]
    if has_mask:
        # int8 mask: 4x fewer HBM bytes than an f32 additive bias; the
        # compare+select runs on the VPU under MXU slack.
        mask_p = pad_to(attn_mask.astype(jnp.int8), (B_p, Lq_p, Lk_p))
        in_specs.append(blk(Lq_p, Lk_p))
        args.append(mask_p)

    kernel = functools.partial(_sdpa_kernel, scale=scale_val, has_mask=has_mask,
                               lk_valid=Lk, lk_padded=Lk_p)

    out_p, attn_p = pl.pallas_call(
        kernel,
        out_shape=(jax.ShapeDtypeStruct((B_p, Lq_p, Dv_p), out_dtype),
                   jax.ShapeDtypeStruct((B_p, Lq_p, Lk_p), out_dtype)),
        grid=grid,
        in_specs=in_specs,
        out_specs=(blk(Lq_p, Dv_p), blk(Lq_p, Lk_p)),
        compiler_params=pltpu.CompilerParams(
            dimension_semantics=("parallel",),        # batch blocks are independent
            vmem_limit_bytes=48 * 1024 * 1024),       # headroom on all generations
    )(*args)

    return out_p[:B, :Lq, :Dv], attn_p[:B, :Lq, :Lk]


# --------------------------------------------------------------------------
# Pure-JAX reference (torch semantics, for a correctness sanity check)
# --------------------------------------------------------------------------
def _ref_sdpa(q, k, v, scale=None, attn_mask=None):
    s = jnp.einsum("bqd,bkd->bqk", q.astype(jnp.float32), k.astype(jnp.float32))
    if scale is not None:
        s = s * scale
    if attn_mask is not None:
        s = jnp.where(attn_mask.astype(bool), -jnp.inf, s)
    a = jax.nn.softmax(s, axis=-1)
    out = jnp.einsum("bqk,bkd->bqd", a, v.astype(jnp.float32))
    return out, a


# --------------------------------------------------------------------------
# Main
# --------------------------------------------------------------------------
if __name__ == "__main__":
    B, Lq, Lk, Dk, Dv = 2, 8, 16, 32, 32

    key = jax.random.PRNGKey(0)
    kq, kk, kv = jax.random.split(key, 3)
    q = jax.random.normal(kq, (B, Lq, Dk), dtype=jnp.float32)
    k = jax.random.normal(kk, (B, Lk, Dk), dtype=jnp.float32)
    v = jax.random.normal(kv, (B, Lk, Dv), dtype=jnp.float32)

    scale = float(Dk) ** (-0.5)

    # Boolean mask (True == masked).  Partial per row so no row is fully masked
    # (torch produces NaN rows in that degenerate case; this kernel gives a
    # uniform distribution instead -- documented divergence).
    attn_mask = jnp.zeros((B, Lq, Lk), dtype=bool)
    attn_mask = attn_mask.at[0, :, -1].set(True)
    attn_mask = attn_mask.at[1, :, Lk // 2:].set(True)

    # Masked + scaled path.
    out, attn = scaled_dot_product_attention(q, k, v, scale=scale, attn_mask=attn_mask)
    # Default path (no scale, no mask).
    out_nm, attn_nm = scaled_dot_product_attention(q, k, v)
    jax.block_until_ready((out, attn, out_nm, attn_nm))

    # Correctness vs. the pure-JAX (torch-semantics) reference.
    r_out, r_attn = _ref_sdpa(q, k, v, scale=scale, attn_mask=attn_mask)
    r_out_nm, r_attn_nm = _ref_sdpa(q, k, v)
    assert jnp.allclose(out, r_out, rtol=2e-3, atol=2e-3)
    assert jnp.allclose(attn, r_attn, rtol=2e-3, atol=2e-3)
    assert jnp.allclose(out_nm, r_out_nm, rtol=2e-3, atol=2e-3)
    assert jnp.allclose(attn_nm, r_attn_nm, rtol=2e-3, atol=2e-3)

    # bf16 path smoke-test: bf16 MXU operands with f32 accumulation, bf16 outputs.
    out_bf, attn_bf = scaled_dot_product_attention(
        q.astype(jnp.bfloat16), k.astype(jnp.bfloat16), v.astype(jnp.bfloat16),
        scale=scale, attn_mask=attn_mask)
    jax.block_until_ready((out_bf, attn_bf))
    assert bool(jnp.isfinite(out_bf.astype(jnp.float32)).all())
    assert bool(jnp.isfinite(attn_bf.astype(jnp.float32)).all())

    print("KERNEL_OK")
</pallas_src>

<mosaic_0001>
module attributes {stable_mosaic.version = 11 : i64} {
  func.func @_sdpa_kernel(%arg0: i32, %arg1: memref<2x8x128xf32, #tpu.memory_space<vmem>>, %arg2: memref<2x128x128xf32, #tpu.memory_space<vmem>>, %arg3: memref<2x128x128xf32, #tpu.memory_space<vmem>>, %arg4: memref<2x8x128xi8, #tpu.memory_space<vmem>>, %arg5: memref<2x8x128xf32, #tpu.memory_space<vmem>>, %arg6: memref<2x8x128xf32, #tpu.memory_space<vmem>>) attributes {dimension_semantics = [#tpu.dimension_semantics<parallel>], iteration_bounds = array<i64: 1>, scalar_prefetch = 0 : i64, scratch_operands = 0 : i64, tpu.core_type = #tpu.core_type<tc>, window_params = [{transform_indices = @transform_0, window_bounds = array<i64: 2, 8, 128>}, {transform_indices = @transform_1, window_bounds = array<i64: 2, 128, 128>}, {transform_indices = @transform_2, window_bounds = array<i64: 2, 128, 128>}, {transform_indices = @transform_3, window_bounds = array<i64: 2, 8, 128>}, {transform_indices = @transform_4, window_bounds = array<i64: 2, 8, 128>}, {transform_indices = @transform_5, window_bounds = array<i64: 2, 8, 128>}]} {
    %c0 = arith.constant 0 : index
    %c0_0 = arith.constant 0 : index
    %c0_1 = arith.constant 0 : index
    %0 = vector.load %arg1[%c0, %c0_0, %c0_1] : memref<2x8x128xf32, #tpu.memory_space<vmem>>, vector<2x8x128xf32>
    %c0_2 = arith.constant 0 : index
    %c0_3 = arith.constant 0 : index
    %c0_4 = arith.constant 0 : index
    %1 = vector.load %arg2[%c0_2, %c0_3, %c0_4] : memref<2x128x128xf32, #tpu.memory_space<vmem>>, vector<2x128x128xf32>
    %c0_5 = arith.constant 0 : index
    %c0_6 = arith.constant 0 : index
    %c0_7 = arith.constant 0 : index
    %2 = vector.load %arg3[%c0_5, %c0_6, %c0_7] : memref<2x128x128xf32, #tpu.memory_space<vmem>>, vector<2x128x128xf32>
    %cst = arith.constant dense<0.000000e+00> : vector<2x8x128xf32>
    %3 = tpu.matmul %0, %1, %cst {dimension_numbers = #tpu.dot_dimension_numbers<[2], [2], [1], [1], [0, 0, 0, 1, 1, 1], [0], [0]>} : vector<2x8x128xf32>, vector<2x128x128xf32>, vector<2x8x128xf32> -> vector<2x8x128xf32>
    %cst_8 = arith.constant 0.176776692 : f32
    %4 = vector.broadcast %cst_8 : f32 to vector<2x8x128xf32>
    %5 = arith.mulf %3, %4 : vector<2x8x128xf32>
    %c0_9 = arith.constant 0 : index
    %c0_10 = arith.constant 0 : index
    %c0_11 = arith.constant 0 : index
    %6 = vector.load %arg4[%c0_9, %c0_10, %c0_11] : memref<2x8x128xi8, #tpu.memory_space<vmem>>, vector<2x8x128xi8>
    %c0_i8 = arith.constant 0 : i8
    %7 = vector.broadcast %c0_i8 : i8 to vector<2x8x128xi8>
    %8 = arith.cmpi ne, %6, %7 : vector<2x8x128xi8>
    %cst_12 = arith.constant -1.000000e+30 : f32
    %9 = vector.broadcast %cst_12 : f32 to vector<2x8x128xf32>
    %10 = arith.select %8, %9, %5 : vector<2x8x128xi1>, vector<2x8x128xf32>
    %11 = tpu.iota {dimensions = array<i32: 2>} : vector<2x8x128xi32>
    %c16_i32 = arith.constant 16 : i32
    %12 = vector.broadcast %c16_i32 : i32 to vector<2x8x128xi32>
    %13 = arith.cmpi slt, %11, %12 : vector<2x8x128xi32>
    %cst_13 = arith.constant -1.000000e+30 : f32
    %14 = vector.broadcast %cst_13 : f32 to vector<2x8x128xf32>
    %15 = arith.select %13, %10, %14 : vector<2x8x128xi1>, vector<2x8x128xf32>
    %cst_14 = arith.constant dense<0xFF800000> : vector<2x8xf32>
    %16 = vector.multi_reduction <maximumf>, %15, %cst_14 [2] : vector<2x8x128xf32> to vector<2x8xf32>
    %17 = vector.shape_cast %16 : vector<2x8xf32> to vector<2x8x1xf32>
    %18 = vector.broadcast %17 : vector<2x8x1xf32> to vector<2x8x128xf32>
    %19 = arith.subf %15, %18 : vector<2x8x128xf32>
    %20 = math.exp %19 : vector<2x8x128xf32>
    %cst_15 = arith.constant dense<0.000000e+00> : vector<2x8xf32>
    %21 = vector.multi_reduction <add>, %20, %cst_15 [2] : vector<2x8x128xf32> to vector<2x8xf32>
    %22 = vector.shape_cast %21 : vector<2x8xf32> to vector<2x8x1xf32>
    %23 = vector.broadcast %22 : vector<2x8x1xf32> to vector<2x8x128xf32>
    %24 = arith.divf %20, %23 : vector<2x8x128xf32>
    %c0_16 = arith.constant 0 : index
    %c0_17 = arith.constant 0 : index
    %c0_18 = arith.constant 0 : index
    %25 = vector.load %arg6[%c0_16, %c0_17, %c0_18] : memref<2x8x128xf32, #tpu.memory_space<vmem>>, vector<2x8x128xf32>
    tpu.vector_store %arg6[%c0_16, %c0_17, %c0_18], %24 {strides = array<i32>} : memref<2x8x128xf32, #tpu.memory_space<vmem>>, vector<2x8x128xf32>,
    %cst_19 = arith.constant dense<0.000000e+00> : vector<2x8x128xf32>
    %26 = tpu.matmul %24, %2, %cst_19 {dimension_numbers = #tpu.dot_dimension_numbers<[2], [1], [1], [2], [0, 0, 0, 1, 1, 2], [0], [0]>} : vector<2x8x128xf32>, vector<2x128x128xf32>, vector<2x8x128xf32> -> vector<2x8x128xf32>
    %c0_20 = arith.constant 0 : index
    %c0_21 = arith.constant 0 : index
    %c0_22 = arith.constant 0 : index
    %27 = vector.load %arg5[%c0_20, %c0_21, %c0_22] : memref<2x8x128xf32, #tpu.memory_space<vmem>>, vector<2x8x128xf32>
    tpu.vector_store %arg5[%c0_20, %c0_21, %c0_22], %26 {strides = array<i32>} : memref<2x8x128xf32, #tpu.memory_space<vmem>>, vector<2x8x128xf32>,
    return
  }
  func.func @transform_0(%arg0: i32) -> (i32, i32, i32) {
    %c0_i32 = arith.constant 0 : i32
    %c0_i32_0 = arith.constant 0 : i32
    %c0_i32_1 = arith.constant 0 : i32
    return %arg0, %c0_i32, %c0_i32_0 : i32, i32, i32
  }
  func.func @transform_1(%arg0: i32) -> (i32, i32, i32) {
    %c0_i32 = arith.constant 0 : i32
    %c0_i32_0 = arith.constant 0 : i32
    %c0_i32_1 = arith.constant 0 : i32
    return %arg0, %c0_i32, %c0_i32_0 : i32, i32, i32
  }
  func.func @transform_2(%arg0: i32) -> (i32, i32, i32) {
    %c0_i32 = arith.constant 0 : i32
    %c0_i32_0 = arith.constant 0 : i32
    %c0_i32_1 = arith.constant 0 : i32
    return %arg0, %c0_i32, %c0_i32_0 : i32, i32, i32
  }
  func.func @transform_3(%arg0: i32) -> (i32, i32, i32) {
    %c0_i32 = arith.constant 0 : i32
    %c0_i32_0 = arith.constant 0 : i32
    %c0_i32_1 = arith.constant 0 : i32
    return %arg0, %c0_i32, %c0_i32_0 : i32, i32, i32
  }
  func.func @transform_4(%arg0: i32) -> (i32, i32, i32) {
    %c0_i32 = arith.constant 0 : i32
    %c0_i32_0 = arith.constant 0 : i32
    %c0_i32_1 = arith.constant 0 : i32
    return %arg0, %c0_i32, %c0_i32_0 : i32, i32, i32
  }
  func.func @transform_5(%arg0: i32) -> (i32, i32, i32) {
    %c0_i32 = arith.constant 0 : i32
    %c0_i32_0 = arith.constant 0 : i32
    %c0_i32_1 = arith.constant 0 : i32
    return %arg0, %c0_i32, %c0_i32_0 : i32, i32, i32
  }
}

</mosaic_0001>

<llo_original>
// kernel: tpu_custom_call.1
$region0: #{tpu_custom_call.1}
  #allocation0 [shape = 'u32[]', space=smem, size = 0x4, offset = 0x4, fixed_abs, tag = 'smem constant byte address 0x4 - core index']
  #allocation1 [shape = 'u32[144,128]{1,0:T(1,128)}', space=vmem, size = 0x12000, scoped, tag = 'internal scratch']
  %s0 = inlined_call_operand.hbm [shape: f32[2,8,128], index: 0, kind: input, shape index: {}]
  %s1 = inlined_call_operand.hbm [shape: f32[2,128,128], index: 1, kind: input, shape index: {}]
  %s2 = inlined_call_operand.hbm [shape: f32[2,128,128], index: 2, kind: input, shape index: {}]
  %s3 = inlined_call_operand.vmem [shape: s8[2,8,128], index: 3, kind: input, shape index: {}]
  %s4 = inlined_call_operand.hbm [shape: f32[2,8,128], index: 4, kind: output, shape index: {0}]
  %s5 = inlined_call_operand.hbm [shape: f32[2,8,128], index: 5, kind: output, shape index: {1}]
  %6 = xla_tuple %s4, %s5
  %s7 = sld [smem:[#allocation0]]
  $region46: #{tpu_custom_call.1} parent=0
    _
  %s9 = ssub.s32 1, %s7
  %s10 = scalar_select 0, %s9, %s7
  $region1: #{tpu_custom_call.1} parent=0
    #allocation2 [shape = 'u8[8192]{0}', space=vmem, size = 0x2000, scoped, tag = 'input window, operand 0, single buffered']
    #allocation3 [shape = 's32[1]{0}', space=sflag, size = 0x4, scoped, tag = 'scoped memory for tpu_custom_call.1']
    #allocation4 [shape = 's32[1]{0}', space=sflag, size = 0x4, scoped, tag = 'scoped memory for tpu_custom_call.1']
    #allocation5 [shape = 'u8[131072]{0}', space=vmem, size = 0x20000, scoped, tag = 'input window, operand 1, single buffered']
    #allocation6 [shape = 's32[1]{0}', space=sflag, size = 0x4, scoped, tag = 'scoped memory for tpu_custom_call.1']
    #allocation7 [shape = 'u8[131072]{0}', space=vmem, size = 0x20000, scoped, tag = 'input window, operand 2, single buffered']
    #allocation8 [shape = 'u8[8192]{0}', space=vmem, size = 0x2000, scoped, tag = 'output window, operand 0, single buffered']
    #allocation9 [shape = 'u8[8192]{0}', space=vmem, size = 0x2000, scoped, tag = 'output window, operand 1, single buffered']
    #allocation10 [shape = 's32[1]{0}', space=sflag, size = 0x4, scoped, tag = 'scoped memory for tpu_custom_call.1']
    %11 = vsyncpa [#allocation3], 0
    %12 = vsyncpa [#allocation6], 0
    %13 = vsyncpa [#allocation4], 0
    %14 = vsyncpa [#allocation10], 0
    // Predicated region
    $region2: #{tpu_custom_call.1} parent=1 // pred_check
      _
    $region3: #{tpu_custom_call.1} parent=1 // pred_check_branch
      %16 = sbr.rel (0) target = $region5
    $region4: #{tpu_custom_call.1} parent=1 // pred_region
      %s18 = ssub.s32 256, 256
      %19 = vsyncadd [#allocation3], %s18
      %s20 = sshll.u32 [#allocation2], 4
      %s21 = int_to_ptr.vmem [resolvable:$true] %s20
      %26 = dma.hbm_to_vmem [thread:$0]  %s0, 256, %s21, [#allocation3], 128, 128, 8
    $region5: #{tpu_custom_call.1} parent=1 // pred_fallthru
      _
    // Predicated region
    $region6: #{tpu_custom_call.1} parent=1 // pred_check
      _
    $region7: #{tpu_custom_call.1} parent=1 // pred_check_branch
      %28 = sbr.rel (0) target = $region9
    $region8: #{tpu_custom_call.1} parent=1 // pred_region
      %s30 = ssub.s32 4096, 4096
      %31 = vsyncadd [#allocation6], %s30
      %s32 = sshll.u32 [#allocation5], 4
      %s33 = int_to_ptr.vmem [resolvable:$true] %s32
      %38 = dma.hbm_to_vmem [thread:$0]  %s1, 4096, %s33, [#allocation6], 128, 128, 8
    $region9: #{tpu_custom_call.1} parent=1 // pred_fallthru
      _
    // Predicated region
    $region10: #{tpu_custom_call.1} parent=1 // pred_check
      _
    $region11: #{tpu_custom_call.1} parent=1 // pred_check_branch
      %40 = sbr.rel (0) target = $region13
    $region12: #{tpu_custom_call.1} parent=1 // pred_region
      %s42 = ssub.s32 4096, 4096
      %43 = vsyncadd [#allocation6], %s42
      %s44 = sshll.u32 [#allocation7], 4
      %s45 = int_to_ptr.vmem [resolvable:$true] %s44
      %50 = dma.hbm_to_vmem [thread:$0]  %s2, 4096, %s45, [#allocation6], 128, 128, 8
    $region13: #{tpu_custom_call.1} parent=1 // pred_fallthru
      _
    // Predicated region
    $region14: #{tpu_custom_call.1} parent=1 // pred_check
      _
    $region15: #{tpu_custom_call.1} parent=1 // pred_check_branch
      %52 = sbr.rel (0) target = $region17
    $region16: #{tpu_custom_call.1} parent=1 // pred_region
      _
    $region17: #{tpu_custom_call.1} parent=1 // pred_fallthru
      _
    // Predicated region
    $region18: #{tpu_custom_call.1} parent=1 // pred_check
      _
    $region19: #{tpu_custom_call.1} parent=1 // pred_check_branch
      %54 = sbr.rel (0) target = $region21
    $region20: #{tpu_custom_call.1} parent=1 // pred_region
      %55 = dma.done [#allocation3], 256
    $region21: #{tpu_custom_call.1} parent=1 // pred_fallthru
      _
    // Predicated region
    $region22: #{tpu_custom_call.1} parent=1 // pred_check
      _
    $region23: #{tpu_custom_call.1} parent=1 // pred_check_branch
      %57 = sbr.rel (0) target = $region25
    $region24: #{tpu_custom_call.1} parent=1 // pred_region
      %58 = dma.done [#allocation6], 4096
    $region25: #{tpu_custom_call.1} parent=1 // pred_fallthru
      _
    // Predicated region
    $region26: #{tpu_custom_call.1} parent=1 // pred_check
      _
    $region27: #{tpu_custom_call.1} parent=1 // pred_check_branch
      %60 = sbr.rel (0) target = $region29
    $region28: #{tpu_custom_call.1} parent=1 // pred_region
      %61 = dma.done [#allocation6], 4096
    $region29: #{tpu_custom_call.1} parent=1 // pred_fallthru
      _
    %v64 = vld [vmem:[#allocation2] sm:$0xff]
    %v65 = vld [vmem:[#allocation2 + $0x8] sm:$0xff]
    %v66 = vld [vmem:[#allocation5] sm:$0xff]
    %v67 = vld [vmem:[#allocation5 + $0x8] sm:$0xff]
    %v68 = vld [vmem:[#allocation5 + $0x10] sm:$0xff]
    %v69 = vld [vmem:[#allocation5 + $0x18] sm:$0xff]
    %v70 = vld [vmem:[#allocation5 + $0x20] sm:$0xff]
    %v71 = vld [vmem:[#allocation5 + $0x28] sm:$0xff]
    %v72 = vld [vmem:[#allocation5 + $0x30] sm:$0xff]
    %v73 = vld [vmem:[#allocation5 + $0x38] sm:$0xff]
    %v74 = vld [vmem:[#allocation5 + $0x40] sm:$0xff]
    %v75 = vld [vmem:[#allocation5 + $0x48] sm:$0xff]
    %v76 = vld [vmem:[#allocation5 + $0x50] sm:$0xff]
    %v77 = vld [vmem:[#allocation5 + $0x58] sm:$0xff]
    %v78 = vld [vmem:[#allocation5 + $0x60] sm:$0xff]
    %v79 = vld [vmem:[#allocation5 + $0x68] sm:$0xff]
    %v80 = vld [vmem:[#allocation5 + $0x70] sm:$0xff]
    %v81 = vld [vmem:[#allocation5 + $0x78] sm:$0xff]
    %v82 = vld [vmem:[#allocation5 + $0x80] sm:$0xff]
    %v83 = vld [vmem:[#allocation5 + $0x88] sm:$0xff]
    %v84 = vld [vmem:[#allocation5 + $0x90] sm:$0xff]
    %v85 = vld [vmem:[#allocation5 + $0x98] sm:$0xff]
    %v86 = vld [vmem:[#allocation5 + $0xa0] sm:$0xff]
    %v87 = vld [vmem:[#allocation5 + $0xa8] sm:$0xff]
    %v88 = vld [vmem:[#allocation5 + $0xb0] sm:$0xff]
    %v89 = vld [vmem:[#allocation5 + $0xb8] sm:$0xff]
    %v90 = vld [vmem:[#allocation5 + $0xc0] sm:$0xff]
    %v91 = vld [vmem:[#allocation5 + $0xc8] sm:$0xff]
    %v92 = vld [vmem:[#allocation5 + $0xd0] sm:$0xff]
    %v93 = vld [vmem:[#allocation5 + $0xd8] sm:$0xff]
    %v94 = vld [vmem:[#allocation5 + $0xe0] sm:$0xff]
    %v95 = vld [vmem:[#allocation5 + $0xe8] sm:$0xff]
    %v96 = vld [vmem:[#allocation5 + $0xf0] sm:$0xff]
    %v97 = vld [vmem:[#allocation5 + $0xf8] sm:$0xff]
    %v98 = vld [vmem:[#allocation7] sm:$0xff]
    %v99 = vld [vmem:[#allocation7 + $0x8] sm:$0xff]
    %v100 = vld [vmem:[#allocation7 + $0x10] sm:$0xff]
    %v101 = vld [vmem:[#allocation7 + $0x18] sm:$0xff]
    %v102 = vld [vmem:[#allocation7 + $0x20] sm:$0xff]
    %v103 = vld [vmem:[#allocation7 + $0x28] sm:$0xff]
    %v104 = vld [vmem:[#allocation7 + $0x30] sm:$0xff]
    %v105 = vld [vmem:[#allocation7 + $0x38] sm:$0xff]
    %v106 = vld [vmem:[#allocation7 + $0x40] sm:$0xff]
    %v107 = vld [vmem:[#allocation7 + $0x48] sm:$0xff]
    %v108 = vld [vmem:[#allocation7 + $0x50] sm:$0xff]
    %v109 = vld [vmem:[#allocation7 + $0x58] sm:$0xff]
    %v110 = vld [vmem:[#allocation7 + $0x60] sm:$0xff]
    %v111 = vld [vmem:[#allocation7 + $0x68] sm:$0xff]
    %v112 = vld [vmem:[#allocation7 + $0x70] sm:$0xff]
    %v113 = vld [vmem:[#allocation7 + $0x78] sm:$0xff]
    %v114 = vld [vmem:[#allocation7 + $0x80] sm:$0xff]
    %v115 = vld [vmem:[#allocation7 + $0x88] sm:$0xff]
    %v116 = vld [vmem:[#allocation7 + $0x90] sm:$0xff]
    %v117 = vld [vmem:[#allocation7 + $0x98] sm:$0xff]
    %v118 = vld [vmem:[#allocation7 + $0xa0] sm:$0xff]
    %v119 = vld [vmem:[#allocation7 + $0xa8] sm:$0xff]
    %v120 = vld [vmem:[#allocation7 + $0xb0] sm:$0xff]
    %v121 = vld [vmem:[#allocation7 + $0xb8] sm:$0xff]
    %v122 = vld [vmem:[#allocation7 + $0xc0] sm:$0xff]
    %v123 = vld [vmem:[#allocation7 + $0xc8] sm:$0xff]
    %v124 = vld [vmem:[#allocation7 + $0xd0] sm:$0xff]
    %v125 = vld [vmem:[#allocation7 + $0xd8] sm:$0xff]
    %v126 = vld [vmem:[#allocation7 + $0xe0] sm:$0xff]
    %v127 = vld [vmem:[#allocation7 + $0xe8] sm:$0xff]
    %v128 = vld [vmem:[#allocation7 + $0xf0] sm:$0xff]
    %v129 = vld [vmem:[#allocation7 + $0xf8] sm:$0xff]
    %130 = vmatprep.subr.mxu0 0.0
    %131 = vmatpush1.xpose.msra.mxu0 %v66
    %132 = vmatprep.subr.mxu0 0.0
    %133 = vmatpush1.xpose.msra.mxu0 %v67
    %134 = vmatprep.subr.mxu0 0.0
    %135 = vmatpush1.xpose.msra.mxu0 %v68
    %136 = vmatprep.subr.mxu0 0.0
    %137 = vmatpush1.xpose.msra.mxu0 %v69
    %138 = vmatprep.subr.mxu0 0.0
    %139 = vmatpush1.xpose.msra.mxu0 %v70
    %140 = vmatprep.subr.mxu0 0.0
    %141 = vmatpush1.xpose.msra.mxu0 %v71
    %142 = vmatprep.subr.mxu0 0.0
    %143 = vmatpush1.xpose.msra.mxu0 %v72
    %144 = vmatprep.subr.mxu0 0.0
    %145 = vmatpush1.xpose.msra.mxu0 %v73
    %146 = vmatprep.subr.mxu0 0.0
    %147 = vmatpush1.xpose.msra.mxu0 %v74
    %148 = vmatprep.subr.mxu0 0.0
    %149 = vmatpush1.xpose.msra.mxu0 %v75
    %150 = vmatprep.subr.mxu0 0.0
    %151 = vmatpush1.xpose.msra.mxu0 %v76
    %152 = vmatprep.subr.mxu0 0.0
    %153 = vmatpush1.xpose.msra.mxu0 %v77
    %154 = vmatprep.subr.mxu0 0.0
    %155 = vmatpush1.xpose.msra.mxu0 %v78
    %156 = vmatprep.subr.mxu0 0.0
    %157 = vmatpush1.xpose.msra.mxu0 %v79
    %158 = vmatprep.subr.mxu0 0.0
    %159 = vmatpush1.xpose.msra.mxu0 %v80
    %160 = vmatprep.subr.mxu0 0.0
    %161 = vmatpush1.xpose.msra.mxu0 %v81
    %162 = vmatprep.subr.mxu0 0.0
    %163 = vmatpush1.xpose.msra.mxu0 0.0
    %164 = vmatprep.subr.mxu0 0.0
    %165 = vmatpush1.xpose.msra.mxu0 0.0
    %166 = vmatprep.subr.mxu0 0.0
    %167 = vmatpush1.xpose.msra.mxu0 0.0
    %168 = vmatprep.subr.mxu0 0.0
    %169 = vmatpush1.xpose.msra.mxu0 0.0
    %170 = vmatprep.subr.mxu0 0.0
    %171 = vmatpush1.xpose.msra.mxu0 0.0
    %172 = vmatprep.subr.mxu0 0.0
    %173 = vmatpush1.xpose.msra.mxu0 0.0
    %174 = vmatprep.subr.mxu0 0.0
    %175 = vmatpush1.xpose.msra.mxu0 0.0
    %176 = vmatprep.subr.mxu0 0.0
    %177 = vmatpush1.xpose.msra.mxu0 0.0
    %178 = vmatprep.subr.mxu0 0.0
    %179 = vmatpush1.xpose.msra.mxu0 0.0
    %180 = vmatprep.subr.mxu0 0.0
    %181 = vmatpush1.xpose.msra.mxu0 0.0
    %182 = vmatprep.subr.mxu0 0.0
    %183 = vmatpush1.xpose.msra.mxu0 0.0
    %184 = vmatprep.subr.mxu0 0.0
    %185 = vmatpush1.xpose.msra.mxu0 0.0
    %186 = vmatprep.subr.mxu0 0.0
    %187 = vmatpush1.xpose.msra.mxu0 0.0
    %188 = vmatprep.subr.mxu0 0.0
    %189 = vmatpush1.xpose.msra.mxu0 0.0
    %190 = vmatprep.subr.mxu0 0.0
    %191 = vmatpush1.xpose.msra.mxu0 0.0
    %192 = vmatprep.subr.mxu0 0.0
    %193 = vmatpush1.xpose.msra.mxu0 0.0
    %194 = vmatprep.mubr.f32.mxu0 0.0
    %195 = vmatmul.mubr.f32.gmra.mrb[0].mxu0 %v64
    %v196 = vpop.f32.mrb[0].mxu0
    %v197 = vadd.f32 0.0, %v196
    %v198 = vpop.f32.mrb[0].mxu0
    %199 = vdwg.mxu0
    %200 = vmatprep.subr.mxu0 0.0
    %201 = vmatpush1.xpose.msra.mxu0 %v82
    %202 = vmatprep.subr.mxu0 0.0
    %203 = vmatpush1.xpose.msra.mxu0 %v83
    %204 = vmatprep.subr.mxu0 0.0
    %205 = vmatpush1.xpose.msra.mxu0 %v84
    %206 = vmatprep.subr.mxu0 0.0
    %207 = vmatpush1.xpose.msra.mxu0 %v85
    %208 = vmatprep.subr.mxu0 0.0
    %209 = vmatpush1.xpose.msra.mxu0 %v86
    %210 = vmatprep.subr.mxu0 0.0
    %211 = vmatpush1.xpose.msra.mxu0 %v87
    %212 = vmatprep.subr.mxu0 0.0
    %213 = vmatpush1.xpose.msra.mxu0 %v88
    %214 = vmatprep.subr.mxu0 0.0
    %215 = vmatpush1.xpose.msra.mxu0 %v89
    %216 = vmatprep.subr.mxu0 0.0
    %217 = vmatpush1.xpose.msra.mxu0 %v90
    %218 = vmatprep.subr.mxu0 0.0
    %219 = vmatpush1.xpose.msra.mxu0 %v91
    %220 = vmatprep.subr.mxu0 0.0
    %221 = vmatpush1.xpose.msra.mxu0 %v92
    %222 = vmatprep.subr.mxu0 0.0
    %223 = vmatpush1.xpose.msra.mxu0 %v93
    %224 = vmatprep.subr.mxu0 0.0
    %225 = vmatpush1.xpose.msra.mxu0 %v94
    %226 = vmatprep.subr.mxu0 0.0
    %227 = vmatpush1.xpose.msra.mxu0 %v95
    %228 = vmatprep.subr.mxu0 0.0
    %229 = vmatpush1.xpose.msra.mxu0 %v96
    %230 = vmatprep.subr.mxu0 0.0
    %231 = vmatpush1.xpose.msra.mxu0 %v97
    %232 = vmatprep.subr.mxu0 0.0
    %233 = vmatpush1.xpose.msra.mxu0 0.0
    %234 = vmatprep.subr.mxu0 0.0
    %235 = vmatpush1.xpose.msra.mxu0 0.0
    %236 = vmatprep.subr.mxu0 0.0
    %237 = vmatpush1.xpose.msra.mxu0 0.0
    %238 = vmatprep.subr.mxu0 0.0
    %239 = vmatpush1.xpose.msra.mxu0 0.0
    %240 = vmatprep.subr.mxu0 0.0
    %241 = vmatpush1.xpose.msra.mxu0 0.0
    %242 = vmatprep.subr.mxu0 0.0
    %243 = vmatpush1.xpose.msra.mxu0 0.0
    %244 = vmatprep.subr.mxu0 0.0
    %245 = vmatpush1.xpose.msra.mxu0 0.0
    %246 = vmatprep.subr.mxu0 0.0
    %247 = vmatpush1.xpose.msra.mxu0 0.0
    %248 = vmatprep.subr.mxu0 0.0
    %249 = vmatpush1.xpose.msra.mxu0 0.0
    %250 = vmatprep.subr.mxu0 0.0
    %251 = vmatpush1.xpose.msra.mxu0 0.0
    %252 = vmatprep.subr.mxu0 0.0
    %253 = vmatpush1.xpose.msra.mxu0 0.0
    %254 = vmatprep.subr.mxu0 0.0
    %255 = vmatpush1.xpose.msra.mxu0 0.0
    %256 = vmatprep.subr.mxu0 0.0
    %257 = vmatpush1.xpose.msra.mxu0 0.0
    %258 = vmatprep.subr.mxu0 0.0
    %259 = vmatpush1.xpose.msra.mxu0 0.0
    %260 = vmatprep.subr.mxu0 0.0
    %261 = vmatpush1.xpose.msra.mxu0 0.0
    %262 = vmatprep.subr.mxu0 0.0
    %263 = vmatpush1.xpose.msra.mxu0 0.0
    %264 = vmatprep.mubr.f32.mxu0 0.0
    %265 = vmatmul.mubr.f32.gmra.mrb[0].mxu0 %v65
    %v266 = vpop.f32.mrb[0].mxu0
    %v267 = vadd.f32 0.0, %v266
    %v268 = vpop.f32.mrb[0].mxu0
    %269 = vdwg.mxu0
    %v270 = vmul.f32 %v197, 0.17677669
    %v271 = vmul.f32 %v267, 0.17677669
    %v272 = vld [vmem:[%s3] sm:$0x3]
    %v273 = vld [vmem:[%s3 + $0x2] sm:$0x3]
    %vm274 = vnez %v272
    %vm275 = vnez %v273
    %v276 = vsel %vm274, 16843009, 0
    %v277 = vsel %vm275, 16843009, 0
    %v278 = vunpack.c.0.s8 %v276
    %v279 = vunpack.c.0.s8 %v277
    %vm280 = vcmp.ne.s32.totalorder %v278, 0
    %vm281 = vcmp.ne.s32.totalorder %v279, 0
    %v282 = vsel %vm280, -1e+30, %v270
    %v283 = vsel %vm281, -1e+30, %v271
    %v284 = vlaneseq
    %v285 = vand.u32 %v284, 127
    %vm286 = vcmp.lt.s32.totalorder %v285, 16
    %v287 = vsel %vm286, %v282, -1e+30
    %v288 = vsel %vm286, %v283, -1e+30
    %289 = vmax.xlane.f32.xlu0 %v287
    %v290 = vpop.xlane.xlu0 %289
    %291 = vmax.xlane.f32.xlu0 %v288
    %v292 = vpop.xlane.xlu0 %291
    %v293 = vsub.f32 %v287, %v290
    %v294 = vsub.f32 %v288, %v292
    %v295 = vmul.f32 %v293, 1.442695
    %v296 = vpow.pop %v295
    %v297 = vmul.f32 %v294, 1.442695
    %v298 = vpow.pop %v297
    %299 = vadd.xlane.f32.xlu0 %v296
    %v300 = vpop.xlane.xlu0 %299
    %301 = vadd.xlane.f32.xlu0 %v298
    %v302 = vpop.xlane.xlu0 %301
    %v303 = vrcp.pop %v300
    %v304 = vmul.f32 %v296, %v303
    %v305 = vrcp.pop %v302
    %v306 = vmul.f32 %v298, %v305
    %307 = vst [vmem:[#allocation9] sm:$0xff] %v304
    %308 = vst [vmem:[#allocation9 + $0x8] sm:$0xff] %v306
    %309 = vmatprep.subr.mxu0 0.0
    %310 = vmatpush1.msra.mxu0 %v98
    %311 = vmatprep.subr.mxu0 0.0
    %312 = vmatpush1.msra.mxu0 %v99
    %313 = vmatprep.subr.mxu0 0.0
    %314 = vmatpush1.msra.mxu0 %v100
    %315 = vmatprep.subr.mxu0 0.0
    %316 = vmatpush1.msra.mxu0 %v101
    %317 = vmatprep.subr.mxu0 0.0
    %318 = vmatpush1.msra.mxu0 %v102
    %319 = vmatprep.subr.mxu0 0.0
    %320 = vmatpush1.msra.mxu0 %v103
    %321 = vmatprep.subr.mxu0 0.0
    %322 = vmatpush1.msra.mxu0 %v104
    %323 = vmatprep.subr.mxu0 0.0
    %324 = vmatpush1.msra.mxu0 %v105
    %325 = vmatprep.subr.mxu0 0.0
    %326 = vmatpush1.msra.mxu0 %v106
    %327 = vmatprep.subr.mxu0 0.0
    %328 = vmatpush1.msra.mxu0 %v107
    %329 = vmatprep.subr.mxu0 0.0
    %330 = vmatpush1.msra.mxu0 %v108
    %331 = vmatprep.subr.mxu0 0.0
    %332 = vmatpush1.msra.mxu0 %v109
    %333 = vmatprep.subr.mxu0 0.0
    %334 = vmatpush1.msra.mxu0 %v110
    %335 = vmatprep.subr.mxu0 0.0
    %336 = vmatpush1.msra.mxu0 %v111
    %337 = vmatprep.subr.mxu0 0.0
    %338 = vmatpush1.msra.mxu0 %v112
    %339 = vmatprep.subr.mxu0 0.0
    %340 = vmatpush1.msra.mxu0 %v113
    %341 = vmatprep.subr.mxu0 0.0
    %342 = vmatpush1.msra.mxu0 0.0
    %343 = vmatprep.subr.mxu0 0.0
    %344 = vmatpush1.msra.mxu0 0.0
    %345 = vmatprep.subr.mxu0 0.0
    %346 = vmatpush1.msra.mxu0 0.0
    %347 = vmatprep.subr.mxu0 0.0
    %348 = vmatpush1.msra.mxu0 0.0
    %349 = vmatprep.subr.mxu0 0.0
    %350 = vmatpush1.msra.mxu0 0.0
    %351 = vmatprep.subr.mxu0 0.0
    %352 = vmatpush1.msra.mxu0 0.0
    %353 = vmatprep.subr.mxu0 0.0
    %354 = vmatpush1.msra.mxu0 0.0
    %355 = vmatprep.subr.mxu0 0.0
    %356 = vmatpush1.msra.mxu0 0.0
    %357 = vmatprep.subr.mxu0 0.0
    %358 = vmatpush1.msra.mxu0 0.0
    %359 = vmatprep.subr.mxu0 0.0
    %360 = vmatpush1.msra.mxu0 0.0
    %361 = vmatprep.subr.mxu0 0.0
    %362 = vmatpush1.msra.mxu0 0.0
    %363 = vmatprep.subr.mxu0 0.0
    %364 = vmatpush1.msra.mxu0 0.0
    %365 = vmatprep.subr.mxu0 0.0
    %366 = vmatpush1.msra.mxu0 0.0
    %367 = vmatprep.subr.mxu0 0.0
    %368 = vmatpush1.msra.mxu0 0.0
    %369 = vmatprep.subr.mxu0 0.0
    %370 = vmatpush1.msra.mxu0 0.0
    %371 = vmatprep.subr.mxu0 0.0
    %372 = vmatpush1.msra.mxu0 0.0
    %373 = vmatprep.mubr.f32.mxu0 0.0
    %374 = vmatmul.mubr.f32.gmra.mrb[0].mxu0 %v304
    %v375 = vpop.f32.mrb[0].mxu0
    %v376 = vadd.f32 0.0, %v375
    %v377 = vpop.f32.mrb[0].mxu0
    %378 = vdwg.mxu0
    %379 = vmatprep.subr.mxu0 0.0
    %380 = vmatpush1.msra.mxu0 %v114
    %381 = vmatprep.subr.mxu0 0.0
    %382 = vmatpush1.msra.mxu0 %v115
    %383 = vmatprep.subr.mxu0 0.0
    %384 = vmatpush1.msra.mxu0 %v116
    %385 = vmatprep.subr.mxu0 0.0
    %386 = vmatpush1.msra.mxu0 %v117
    %387 = vmatprep.subr.mxu0 0.0
    %388 = vmatpush1.msra.mxu0 %v118
    %389 = vmatprep.subr.mxu0 0.0
    %390 = vmatpush1.msra.mxu0 %v119
    %391 = vmatprep.subr.mxu0 0.0
    %392 = vmatpush1.msra.mxu0 %v120
    %393 = vmatprep.subr.mxu0 0.0
    %394 = vmatpush1.msra.mxu0 %v121
    %395 = vmatprep.subr.mxu0 0.0
    %396 = vmatpush1.msra.mxu0 %v122
    %397 = vmatprep.subr.mxu0 0.0
    %398 = vmatpush1.msra.mxu0 %v123
    %399 = vmatprep.subr.mxu0 0.0
    %400 = vmatpush1.msra.mxu0 %v124
    %401 = vmatprep.subr.mxu0 0.0
    %402 = vmatpush1.msra.mxu0 %v125
    %403 = vmatprep.subr.mxu0 0.0
    %404 = vmatpush1.msra.mxu0 %v126
    %405 = vmatprep.subr.mxu0 0.0
    %406 = vmatpush1.msra.mxu0 %v127
    %407 = vmatprep.subr.mxu0 0.0
    %408 = vmatpush1.msra.mxu0 %v128
    %409 = vmatprep.subr.mxu0 0.0
    %410 = vmatpush1.msra.mxu0 %v129
    %411 = vmatprep.subr.mxu0 0.0
    %412 = vmatpush1.msra.mxu0 0.0
    %413 = vmatprep.subr.mxu0 0.0
    %414 = vmatpush1.msra.mxu0 0.0
    %415 = vmatprep.subr.mxu0 0.0
    %416 = vmatpush1.msra.mxu0 0.0
    %417 = vmatprep.subr.mxu0 0.0
    %418 = vmatpush1.msra.mxu0 0.0
    %419 = vmatprep.subr.mxu0 0.0
    %420 = vmatpush1.msra.mxu0 0.0
    %421 = vmatprep.subr.mxu0 0.0
    %422 = vmatpush1.msra.mxu0 0.0
    %423 = vmatprep.subr.mxu0 0.0
    %424 = vmatpush1.msra.mxu0 0.0
    %425 = vmatprep.subr.mxu0 0.0
    %426 = vmatpush1.msra.mxu0 0.0
    %427 = vmatprep.subr.mxu0 0.0
    %428 = vmatpush1.msra.mxu0 0.0
    %429 = vmatprep.subr.mxu0 0.0
    %430 = vmatpush1.msra.mxu0 0.0
    %431 = vmatprep.subr.mxu0 0.0
    %432 = vmatpush1.msra.mxu0 0.0
    %433 = vmatprep.subr.mxu0 0.0
    %434 = vmatpush1.msra.mxu0 0.0
    %435 = vmatprep.subr.mxu0 0.0
    %436 = vmatpush1.msra.mxu0 0.0
    %437 = vmatprep.subr.mxu0 0.0
    %438 = vmatpush1.msra.mxu0 0.0
    %439 = vmatprep.subr.mxu0 0.0
    %440 = vmatpush1.msra.mxu0 0.0
    %441 = vmatprep.subr.mxu0 0.0
    %442 = vmatpush1.msra.mxu0 0.0
    %443 = vmatprep.mubr.f32.mxu0 0.0
    %444 = vmatmul.mubr.f32.gmra.mrb[0].mxu0 %v306
    %v445 = vpop.f32.mrb[0].mxu0
    %v446 = vadd.f32 0.0, %v445
    %v447 = vpop.f32.mrb[0].mxu0
    %448 = vdwg.mxu0
    %449 = vst [vmem:[#allocation8] sm:$0xff] %v376
    %450 = vst [vmem:[#allocation8 + $0x8] sm:$0xff] %v446
    // Predicated region
    $region30: #{tpu_custom_call.1} parent=1 // pred_check
      _
    $region31: #{tpu_custom_call.1} parent=1 // pred_check_branch
      %452 = sbr.rel (0) target = $region33
    $region32: #{tpu_custom_call.1} parent=1 // pred_region
      %s454 = ssub.s32 256, 256
      %455 = vsyncadd [#allocation4], %s454
      %s456 = sshll.u32 [#allocation8], 4
      %s457 = int_to_ptr.vmem [resolvable:$true] %s456
      %462 = dma.vmem_to_hbm [thread:$0]  %s457, 256, %s4, [#allocation4], 128, 128, 8
    $region33: #{tpu_custom_call.1} parent=1 // pred_fallthru
      _
    // Predicated region
    $region34: #{tpu_custom_call.1} parent=1 // pred_check
      _
    $region35: #{tpu_custom_call.1} parent=1 // pred_check_branch
      %464 = sbr.rel (0) target = $region37
    $region36: #{tpu_custom_call.1} parent=1 // pred_region
      %s466 = ssub.s32 256, 256
      %467 = vsyncadd [#allocation10], %s466
      %s468 = sshll.u32 [#allocation9], 4
      %s469 = int_to_ptr.vmem [resolvable:$true] %s468
      %474 = dma.vmem_to_hbm [thread:$0]  %s469, 256, %s5, [#allocation10], 128, 128, 8
    $region37: #{tpu_custom_call.1} parent=1 // pred_fallthru
      _
    // Predicated region
    $region38: #{tpu_custom_call.1} parent=1 // pred_check
      _
    $region39: #{tpu_custom_call.1} parent=1 // pred_check_branch
      %476 = sbr.rel (0) target = $region41
    $region40: #{tpu_custom_call.1} parent=1 // pred_region
      %477 = dma.done [#allocation4], 256
    $region41: #{tpu_custom_call.1} parent=1 // pred_fallthru
      _
    // Predicated region
    $region42: #{tpu_custom_call.1} parent=1 // pred_check
      _
    $region43: #{tpu_custom_call.1} parent=1 // pred_check_branch
      %479 = sbr.rel (0) target = $region45
    $region44: #{tpu_custom_call.1} parent=1 // pred_region
      %480 = dma.done [#allocation10], 256
    $region45: #{tpu_custom_call.1} parent=1 // pred_fallthru
      _
    %481 = vsyncpa [#allocation3], 1
    %482 = vsyncpa [#allocation6], 1
    %483 = vsyncpa [#allocation4], 1
    %484 = vsyncpa [#allocation10], 1

</llo_original>
